<compile_context>
chip_gen: v5e
topology: v5e:2x2
jax: 0.10.0
libtpu: 0.0.40
codegen_flags: <defaults>
</compile_context>

<pallas_src>
import jax
import jax.numpy as jnp
from jax.experimental import pallas as pl
from jax.experimental.pallas import tpu as pltpu


# --------------------------------------------------------------------------
# Kernel
# --------------------------------------------------------------------------
def _double_conv_kernel(x_ref, t1_ref, t2_ref, s1_ref, b1_ref, s2_ref, b2_ref,
                        o_ref, hpad_ref):
    """Fused (conv3x3 + BN + ReLU) x 2 for one batch element.

    x_ref:    (1, H+2, Cin*W)    bf16  row-padded input, lanes = Cin*W
    t1_ref:   (3, Cin*W, Cout*W) bf16  Toeplitz weights of conv1 (one per dy)
    t2_ref:   (3, Cout*W, Cout*W)bf16  Toeplitz weights of conv2
    s*_ref:   (1, Cout*W)        f32   folded BN scale / shift (per channel,
                                       broadcast over W inside the lane dim)
    o_ref:    (1, H, Cout*W)     f32   output, lanes = Cout*W (lane-dense)
    hpad_ref: (H+2, Cout*W)      bf16  VMEM scratch: row-padded intermediate
    """
    H = o_ref.shape[1]

    # ---- conv1: 3 row-shifted matmuls, K = Cin*W, f32 accumulation ----
    acc = jnp.zeros(o_ref.shape[1:], jnp.float32)          # (H, Cout*W)
    for dy in range(3):                                     # static unroll
        acc += jnp.dot(x_ref[0, dy:dy + H, :], t1_ref[dy],
                       preferred_element_type=jnp.float32)

    # folded conv-bias + BatchNorm + ReLU (f32 epilogue, full 128 lanes)
    h = jnp.maximum(acc * s1_ref[...] + b1_ref[...], 0.0)

    # intermediate stays in VMEM (no HBM round-trip); halo rows are zero
    hpad_ref[...] = jnp.zeros_like(hpad_ref)
    hpad_ref[1:H + 1, :] = h.astype(hpad_ref.dtype)

    # ---- conv2: same structure on the padded intermediate ----
    acc = jnp.zeros(o_ref.shape[1:], jnp.float32)
    for dy in range(3):
        acc += jnp.dot(hpad_ref[dy:dy + H, :], t2_ref[dy],
                       preferred_element_type=jnp.float32)

    y = jnp.maximum(acc * s2_ref[...] + b2_ref[...], 0.0)
    o_ref[0] = y.astype(o_ref.dtype)


# --------------------------------------------------------------------------
# Weight / BN relayout helpers (plain JAX, outside the kernel)
# --------------------------------------------------------------------------
def _toeplitz_weight(w, W):
    """(Cout, Cin, 3, 3) PyTorch conv weight -> (3, Cin*W, Cout*W) banded matmul
    weights.  T[dy, ci*W + wi, co*W + wo] = w[co, ci, dy, wi - wo + 1] inside the
    band, 0 outside (the truncated band realizes padding=1 along W)."""
    Cout, Cin, _, _ = w.shape
    wi = jnp.arange(W)[:, None]
    wo = jnp.arange(W)[None, :]
    dx = wi - wo + 1                                  # (W, W)
    valid = (dx >= 0) & (dx <= 2)
    dx_c = jnp.clip(dx, 0, 2)

    wt = jnp.transpose(w, (2, 1, 0, 3))               # (3, Cin, Cout, 3)
    band = wt[:, :, :, dx_c]                          # (3, Cin, Cout, W, W)
    band = jnp.where(valid[None, None, None], band, 0.0)
    t = jnp.transpose(band, (0, 1, 3, 2, 4))          # (3, Cin, Wi, Cout, Wo)
    return t.reshape(3, Cin * W, Cout * W)


def _fold_bn(bias, gamma, beta, mean, var, W, eps=1e-5):
    """Fold conv bias + eval-mode BatchNorm into a per-channel scale/shift,
    broadcast over W so it lines up with the (co*W + wo) lane layout."""
    scale = gamma / jnp.sqrt(var + eps)
    shift = beta + scale * (bias - mean)
    return (jnp.repeat(scale, W).reshape(1, -1).astype(jnp.float32),
            jnp.repeat(shift, W).reshape(1, -1).astype(jnp.float32))


# --------------------------------------------------------------------------
# Forward pass
# --------------------------------------------------------------------------
@jax.jit
def double_conv_forward(x_nchw, params):
    """DoubleConv forward. x_nchw: (B, Cin, H, W) f32 -> (B, Cout, H, W) f32."""
    B, Cin, H, W = x_nchw.shape
    Cout = params["w1"].shape[0]
    CinW, CoutW = Cin * W, Cout * W

    # (B, Cin, H, W) -> (B, H, Cin*W), pad rows by 1 (zero pad), cast to bf16.
    x = jnp.transpose(x_nchw, (0, 2, 1, 3)).reshape(B, H, CinW)
    x = jnp.pad(x, ((0, 0), (1, 1), (0, 0))).astype(jnp.bfloat16)

    t1 = _toeplitz_weight(params["w1"], W).astype(jnp.bfloat16)   # (3,CinW,CoutW)
    t2 = _toeplitz_weight(params["w2"], W).astype(jnp.bfloat16)   # (3,CoutW,CoutW)
    s1, b1 = _fold_bn(params["b1"], params["gamma1"], params["beta1"],
                      params["mean1"], params["var1"], W)
    s2, b2 = _fold_bn(params["b2"], params["gamma2"], params["beta2"],
                      params["mean2"], params["var2"], W)

    out_flat = pl.pallas_call(
        _double_conv_kernel,
        out_shape=jax.ShapeDtypeStruct((B, H, CoutW), jnp.float32),
        grid_spec=pltpu.PrefetchScalarGridSpec(
            num_scalar_prefetch=0,
            grid=(B,),
            in_specs=[
                pl.BlockSpec((1, H + 2, CinW), lambda b: (b, 0, 0)),
                pl.BlockSpec((3, CinW, CoutW), lambda b: (0, 0, 0)),
                pl.BlockSpec((3, CoutW, CoutW), lambda b: (0, 0, 0)),
                pl.BlockSpec((1, CoutW), lambda b: (0, 0)),
                pl.BlockSpec((1, CoutW), lambda b: (0, 0)),
                pl.BlockSpec((1, CoutW), lambda b: (0, 0)),
                pl.BlockSpec((1, CoutW), lambda b: (0, 0)),
            ],
            out_specs=pl.BlockSpec((1, H, CoutW), lambda b: (b, 0, 0)),
            scratch_shapes=[pltpu.VMEM((H + 2, CoutW), jnp.bfloat16)],
        ),
        compiler_params=pltpu.CompilerParams(
            dimension_semantics=("parallel",)),
    )(x, t1, t2, s1, b1, s2, b2)

    # (B, H, Cout*W) -> (B, Cout, H, W)
    return out_flat.reshape(B, H, Cout, W).transpose(0, 2, 1, 3)


# --------------------------------------------------------------------------
# Params + reference (for a self-check)
# --------------------------------------------------------------------------
def init_double_conv_params(key, in_ch, out_ch):
    """Deterministic synthetic params matching DoubleConv.__init__ shapes."""
    k1, k2, k3, k4 = jax.random.split(key, 4)
    return {
        "w1": 0.1 * jax.random.normal(k1, (out_ch, in_ch, 3, 3), jnp.float32),
        "b1": 0.1 * jax.random.normal(k2, (out_ch,), jnp.float32),
        "gamma1": jnp.ones((out_ch,), jnp.float32),
        "beta1": jnp.zeros((out_ch,), jnp.float32),
        "mean1": jnp.zeros((out_ch,), jnp.float32),
        "var1": jnp.ones((out_ch,), jnp.float32),
        "w2": 0.1 * jax.random.normal(k3, (out_ch, out_ch, 3, 3), jnp.float32),
        "b2": 0.1 * jax.random.normal(k4, (out_ch,), jnp.float32),
        "gamma2": jnp.ones((out_ch,), jnp.float32),
        "beta2": jnp.zeros((out_ch,), jnp.float32),
        "mean2": jnp.zeros((out_ch,), jnp.float32),
        "var2": jnp.ones((out_ch,), jnp.float32),
    }


def _reference_double_conv(x_nchw, params, eps=1e-5):
    """Pure-JAX reference mirroring the kernel's bf16 matmul operands."""
    def conv_bn_relu(x, w, b, gamma, beta, mean, var):
        xb = x.astype(jnp.bfloat16).astype(jnp.float32)
        wb = w.astype(jnp.bfloat16).astype(jnp.float32)
        y = jax.lax.conv_general_dilated(
            xb, wb, window_strides=(1, 1), padding=((1, 1), (1, 1)),
            dimension_numbers=("NCHW", "OIHW", "NCHW"),
            precision=jax.lax.Precision.HIGHEST)
        scale = gamma / jnp.sqrt(var + eps)
        shift = beta + scale * (b - mean)
        y = y * scale[None, :, None, None] + shift[None, :, None, None]
        return jnp.maximum(y, 0.0)

    h = conv_bn_relu(x_nchw, params["w1"], params["b1"], params["gamma1"],
                     params["beta1"], params["mean1"], params["var1"])
    h = h.astype(jnp.bfloat16).astype(jnp.float32)  # kernel stores h in bf16
    return conv_bn_relu(h, params["w2"], params["b2"], params["gamma2"],
                        params["beta2"], params["mean2"], params["var2"])


if __name__ == "__main__":
    key = jax.random.PRNGKey(0)
    kx, kp = jax.random.split(key)

    B, in_ch, out_ch, H, W = 2, 4, 8, 16, 16
    x = jax.random.normal(kx, (B, in_ch, H, W), jnp.float32)
    params = init_double_conv_params(kp, in_ch, out_ch)

    out = double_conv_forward(x, params)
    out = jax.block_until_ready(out)

    assert out.shape == (B, out_ch, H, W), out.shape
    assert out.dtype == jnp.float32
    assert bool(jnp.all(out >= 0.0))  # ReLU epilogue

    ref = _reference_double_conv(x, params)
    err = float(jnp.max(jnp.abs(out - ref)))
    assert err < 1e-2, f"max |kernel - ref| = {err}"

    print("KERNEL_OK")
</pallas_src>

<mosaic_0001>
module attributes {stable_mosaic.version = 11 : i64} {
  func.func @_double_conv_kernel(%arg0: i32, %arg1: memref<1x18x64xbf16, #tpu.memory_space<vmem>>, %arg2: memref<3x64x128xbf16, #tpu.memory_space<vmem>>, %arg3: memref<3x128x128xbf16, #tpu.memory_space<vmem>>, %arg4: memref<1x128xf32, #tpu.memory_space<vmem>>, %arg5: memref<1x128xf32, #tpu.memory_space<vmem>>, %arg6: memref<1x128xf32, #tpu.memory_space<vmem>>, %arg7: memref<1x128xf32, #tpu.memory_space<vmem>>, %arg8: memref<1x16x128xf32, #tpu.memory_space<vmem>>, %arg9: memref<18x128xbf16, #tpu.memory_space<vmem>>) attributes {dimension_semantics = [#tpu.dimension_semantics<parallel>], iteration_bounds = array<i64: 2>, scalar_prefetch = 0 : i64, scratch_operands = 1 : i64, tpu.core_type = #tpu.core_type<tc>, window_params = [{transform_indices = @transform_0, window_bounds = array<i64: 1, 18, 64>}, {pipeline_mode = #tpu.pipeline_mode<synchronous>, transform_indices = @transform_1, window_bounds = array<i64: 3, 64, 128>}, {pipeline_mode = #tpu.pipeline_mode<synchronous>, transform_indices = @transform_2, window_bounds = array<i64: 3, 128, 128>}, {pipeline_mode = #tpu.pipeline_mode<synchronous>, transform_indices = @transform_3, window_bounds = array<i64: 1, 128>}, {pipeline_mode = #tpu.pipeline_mode<synchronous>, transform_indices = @transform_4, window_bounds = array<i64: 1, 128>}, {pipeline_mode = #tpu.pipeline_mode<synchronous>, transform_indices = @transform_5, window_bounds = array<i64: 1, 128>}, {pipeline_mode = #tpu.pipeline_mode<synchronous>, transform_indices = @transform_6, window_bounds = array<i64: 1, 128>}, {transform_indices = @transform_7, window_bounds = array<i64: 1, 16, 128>}]} {
    %cst = arith.constant 0.000000e+00 : f32
    %0 = vector.broadcast %cst : f32 to vector<16x128xf32>
    %c0 = arith.constant 0 : index
    %c0_0 = arith.constant 0 : index
    %c0_1 = arith.constant 0 : index
    %1 = vector.load %arg1[%c0, %c0_0, %c0_1] : memref<1x18x64xbf16, #tpu.memory_space<vmem>>, vector<1x16x64xbf16>
    %2 = vector.shape_cast %1 : vector<1x16x64xbf16> to vector<16x64xbf16>
    %c0_2 = arith.constant 0 : index
    %c0_3 = arith.constant 0 : index
    %c0_4 = arith.constant 0 : index
    %3 = vector.load %arg2[%c0_2, %c0_3, %c0_4] : memref<3x64x128xbf16, #tpu.memory_space<vmem>>, vector<1x64x128xbf16>
    %4 = vector.shape_cast %3 : vector<1x64x128xbf16> to vector<64x128xbf16>
    %cst_5 = arith.constant dense<0.000000e+00> : vector<16x128xf32>
    %5 = tpu.matmul %2, %4, %cst_5 {dimension_numbers = #tpu.dot_dimension_numbers<[1], [0], [0], [1], [0, 0, 1, 1], [], []>} : vector<16x64xbf16>, vector<64x128xbf16>, vector<16x128xf32> -> vector<16x128xf32>
    %6 = arith.addf %0, %5 : vector<16x128xf32>
    %c0_6 = arith.constant 0 : index
    %c1 = arith.constant 1 : index
    %c0_7 = arith.constant 0 : index
    %7 = vector.load %arg1[%c0_6, %c1, %c0_7] : memref<1x18x64xbf16, #tpu.memory_space<vmem>>, vector<1x16x64xbf16>
    %8 = vector.shape_cast %7 : vector<1x16x64xbf16> to vector<16x64xbf16>
    %c1_8 = arith.constant 1 : index
    %c0_9 = arith.constant 0 : index
    %c0_10 = arith.constant 0 : index
    %9 = vector.load %arg2[%c1_8, %c0_9, %c0_10] : memref<3x64x128xbf16, #tpu.memory_space<vmem>>, vector<1x64x128xbf16>
    %10 = vector.shape_cast %9 : vector<1x64x128xbf16> to vector<64x128xbf16>
    %cst_11 = arith.constant dense<0.000000e+00> : vector<16x128xf32>
    %11 = tpu.matmul %8, %10, %cst_11 {dimension_numbers = #tpu.dot_dimension_numbers<[1], [0], [0], [1], [0, 0, 1, 1], [], []>} : vector<16x64xbf16>, vector<64x128xbf16>, vector<16x128xf32> -> vector<16x128xf32>
    %12 = arith.addf %6, %11 : vector<16x128xf32>
    %c0_12 = arith.constant 0 : index
    %c2 = arith.constant 2 : index
    %c0_13 = arith.constant 0 : index
    %13 = vector.load %arg1[%c0_12, %c2, %c0_13] : memref<1x18x64xbf16, #tpu.memory_space<vmem>>, vector<1x16x64xbf16>
    %14 = vector.shape_cast %13 : vector<1x16x64xbf16> to vector<16x64xbf16>
    %c2_14 = arith.constant 2 : index
    %c0_15 = arith.constant 0 : index
    %c0_16 = arith.constant 0 : index
    %15 = vector.load %arg2[%c2_14, %c0_15, %c0_16] : memref<3x64x128xbf16, #tpu.memory_space<vmem>>, vector<1x64x128xbf16>
    %16 = vector.shape_cast %15 : vector<1x64x128xbf16> to vector<64x128xbf16>
    %cst_17 = arith.constant dense<0.000000e+00> : vector<16x128xf32>
    %17 = tpu.matmul %14, %16, %cst_17 {dimension_numbers = #tpu.dot_dimension_numbers<[1], [0], [0], [1], [0, 0, 1, 1], [], []>} : vector<16x64xbf16>, vector<64x128xbf16>, vector<16x128xf32> -> vector<16x128xf32>
    %18 = arith.addf %12, %17 : vector<16x128xf32>
    %c0_18 = arith.constant 0 : index
    %c0_19 = arith.constant 0 : index
    %19 = vector.load %arg4[%c0_18, %c0_19] : memref<1x128xf32, #tpu.memory_space<vmem>>, vector<1x128xf32>
    %20 = vector.broadcast %19 : vector<1x128xf32> to vector<16x128xf32>
    %21 = arith.mulf %18, %20 : vector<16x128xf32>
    %c0_20 = arith.constant 0 : index
    %c0_21 = arith.constant 0 : index
    %22 = vector.load %arg5[%c0_20, %c0_21] : memref<1x128xf32, #tpu.memory_space<vmem>>, vector<1x128xf32>
    %23 = vector.broadcast %22 : vector<1x128xf32> to vector<16x128xf32>
    %24 = arith.addf %21, %23 : vector<16x128xf32>
    %cst_22 = arith.constant 0.000000e+00 : f32
    %25 = vector.broadcast %cst_22 : f32 to vector<16x128xf32>
    %26 = arith.maximumf %24, %25 : vector<16x128xf32>
    %cst_23 = arith.constant 0.000000e+00 : bf16
    %27 = vector.broadcast %cst_23 : bf16 to vector<18x128xbf16>
    %c0_24 = arith.constant 0 : index
    %c0_25 = arith.constant 0 : index
    %28 = vector.load %arg9[%c0_24, %c0_25] : memref<18x128xbf16, #tpu.memory_space<vmem>>, vector<18x128xbf16>
    tpu.vector_store %arg9[%c0_24, %c0_25], %27 {strides = array<i32>} : memref<18x128xbf16, #tpu.memory_space<vmem>>, vector<18x128xbf16>,
    %29 = arith.truncf %26 : vector<16x128xf32> to vector<16x128xbf16>
    %c1_26 = arith.constant 1 : index
    %c0_27 = arith.constant 0 : index
    %30 = vector.load %arg9[%c1_26, %c0_27] : memref<18x128xbf16, #tpu.memory_space<vmem>>, vector<16x128xbf16>
    tpu.vector_store %arg9[%c1_26, %c0_27], %29 {strides = array<i32>} : memref<18x128xbf16, #tpu.memory_space<vmem>>, vector<16x128xbf16>,
    %cst_28 = arith.constant 0.000000e+00 : f32
    %31 = vector.broadcast %cst_28 : f32 to vector<16x128xf32>
    %c0_29 = arith.constant 0 : index
    %c0_30 = arith.constant 0 : index
    %32 = vector.load %arg9[%c0_29, %c0_30] : memref<18x128xbf16, #tpu.memory_space<vmem>>, vector<16x128xbf16>
    %c0_31 = arith.constant 0 : index
    %c0_32 = arith.constant 0 : index
    %c0_33 = arith.constant 0 : index
    %33 = vector.load %arg3[%c0_31, %c0_32, %c0_33] : memref<3x128x128xbf16, #tpu.memory_space<vmem>>, vector<1x128x128xbf16>
    %34 = vector.shape_cast %33 : vector<1x128x128xbf16> to vector<128x128xbf16>
    %cst_34 = arith.constant dense<0.000000e+00> : vector<16x128xf32>
    %35 = tpu.matmul %32, %34, %cst_34 {dimension_numbers = #tpu.dot_dimension_numbers<[1], [0], [0], [1], [0, 0, 1, 1], [], []>} : vector<16x128xbf16>, vector<128x128xbf16>, vector<16x128xf32> -> vector<16x128xf32>
    %36 = arith.addf %31, %35 : vector<16x128xf32>
    %c1_35 = arith.constant 1 : index
    %c0_36 = arith.constant 0 : index
    %37 = vector.load %arg9[%c1_35, %c0_36] : memref<18x128xbf16, #tpu.memory_space<vmem>>, vector<16x128xbf16>
    %c1_37 = arith.constant 1 : index
    %c0_38 = arith.constant 0 : index
    %c0_39 = arith.constant 0 : index
    %38 = vector.load %arg3[%c1_37, %c0_38, %c0_39] : memref<3x128x128xbf16, #tpu.memory_space<vmem>>, vector<1x128x128xbf16>
    %39 = vector.shape_cast %38 : vector<1x128x128xbf16> to vector<128x128xbf16>
    %cst_40 = arith.constant dense<0.000000e+00> : vector<16x128xf32>
    %40 = tpu.matmul %37, %39, %cst_40 {dimension_numbers = #tpu.dot_dimension_numbers<[1], [0], [0], [1], [0, 0, 1, 1], [], []>} : vector<16x128xbf16>, vector<128x128xbf16>, vector<16x128xf32> -> vector<16x128xf32>
    %41 = arith.addf %36, %40 : vector<16x128xf32>
    %c2_41 = arith.constant 2 : index
    %c0_42 = arith.constant 0 : index
    %42 = vector.load %arg9[%c2_41, %c0_42] : memref<18x128xbf16, #tpu.memory_space<vmem>>, vector<16x128xbf16>
    %c2_43 = arith.constant 2 : index
    %c0_44 = arith.constant 0 : index
    %c0_45 = arith.constant 0 : index
    %43 = vector.load %arg3[%c2_43, %c0_44, %c0_45] : memref<3x128x128xbf16, #tpu.memory_space<vmem>>, vector<1x128x128xbf16>
    %44 = vector.shape_cast %43 : vector<1x128x128xbf16> to vector<128x128xbf16>
    %cst_46 = arith.constant dense<0.000000e+00> : vector<16x128xf32>
    %45 = tpu.matmul %42, %44, %cst_46 {dimension_numbers = #tpu.dot_dimension_numbers<[1], [0], [0], [1], [0, 0, 1, 1], [], []>} : vector<16x128xbf16>, vector<128x128xbf16>, vector<16x128xf32> -> vector<16x128xf32>
    %46 = arith.addf %41, %45 : vector<16x128xf32>
    %c0_47 = arith.constant 0 : index
    %c0_48 = arith.constant 0 : index
    %47 = vector.load %arg6[%c0_47, %c0_48] : memref<1x128xf32, #tpu.memory_space<vmem>>, vector<1x128xf32>
    %48 = vector.broadcast %47 : vector<1x128xf32> to vector<16x128xf32>
    %49 = arith.mulf %46, %48 : vector<16x128xf32>
    %c0_49 = arith.constant 0 : index
    %c0_50 = arith.constant 0 : index
    %50 = vector.load %arg7[%c0_49, %c0_50] : memref<1x128xf32, #tpu.memory_space<vmem>>, vector<1x128xf32>
    %51 = vector.broadcast %50 : vector<1x128xf32> to vector<16x128xf32>
    %52 = arith.addf %49, %51 : vector<16x128xf32>
    %cst_51 = arith.constant 0.000000e+00 : f32
    %53 = vector.broadcast %cst_51 : f32 to vector<16x128xf32>
    %54 = arith.maximumf %52, %53 : vector<16x128xf32>
    %c0_52 = arith.constant 0 : index
    %c0_53 = arith.constant 0 : index
    %c0_54 = arith.constant 0 : index
    %55 = vector.load %arg8[%c0_52, %c0_53, %c0_54] : memref<1x16x128xf32, #tpu.memory_space<vmem>>, vector<1x16x128xf32>
    %56 = vector.shape_cast %55 : vector<1x16x128xf32> to vector<16x128xf32>
    %57 = vector.shape_cast %54 : vector<16x128xf32> to vector<1x16x128xf32>
    tpu.vector_store %arg8[%c0_52, %c0_53, %c0_54], %57 {strides = array<i32>} : memref<1x16x128xf32, #tpu.memory_space<vmem>>, vector<1x16x128xf32>,
    return
  }
  func.func @transform_0(%arg0: i32) -> (i32, i32, i32) {
    %c0_i32 = arith.constant 0 : i32
    %c0_i32_0 = arith.constant 0 : i32
    %c0_i32_1 = arith.constant 0 : i32
    return %arg0, %c0_i32, %c0_i32_0 : i32, i32, i32
  }
  func.func @transform_1(%arg0: i32) -> (i32, i32, i32) {
    %c0_i32 = arith.constant 0 : i32
    %c0_i32_0 = arith.constant 0 : i32
    %c0_i32_1 = arith.constant 0 : i32
    %c0_i32_2 = arith.constant 0 : i32
    return %c0_i32, %c0_i32_0, %c0_i32_1 : i32, i32, i32
  }
  func.func @transform_2(%arg0: i32) -> (i32, i32, i32) {
    %c0_i32 = arith.constant 0 : i32
    %c0_i32_0 = arith.constant 0 : i32
    %c0_i32_1 = arith.constant 0 : i32
    %c0_i32_2 = arith.constant 0 : i32
    return %c0_i32, %c0_i32_0, %c0_i32_1 : i32, i32, i32
  }
  func.func @transform_3(%arg0: i32) -> (i32, i32) {
    %c0_i32 = arith.constant 0 : i32
    %c0_i32_0 = arith.constant 0 : i32
    %c0_i32_1 = arith.constant 0 : i32
    return %c0_i32, %c0_i32_0 : i32, i32
  }
  func.func @transform_4(%arg0: i32) -> (i32, i32) {
    %c0_i32 = arith.constant 0 : i32
    %c0_i32_0 = arith.constant 0 : i32
    %c0_i32_1 = arith.constant 0 : i32
    return %c0_i32, %c0_i32_0 : i32, i32
  }
  func.func @transform_5(%arg0: i32) -> (i32, i32) {
    %c0_i32 = arith.constant 0 : i32
    %c0_i32_0 = arith.constant 0 : i32
    %c0_i32_1 = arith.constant 0 : i32
    return %c0_i32, %c0_i32_0 : i32, i32
  }
  func.func @transform_6(%arg0: i32) -> (i32, i32) {
    %c0_i32 = arith.constant 0 : i32
    %c0_i32_0 = arith.constant 0 : i32
    %c0_i32_1 = arith.constant 0 : i32
    return %c0_i32, %c0_i32_0 : i32, i32
  }
  func.func @transform_7(%arg0: i32) -> (i32, i32, i32) {
    %c0_i32 = arith.constant 0 : i32
    %c0_i32_0 = arith.constant 0 : i32
    %c0_i32_1 = arith.constant 0 : i32
    return %arg0, %c0_i32, %c0_i32_0 : i32, i32, i32
  }
}

</mosaic_0001>

<llo_original>
// kernel: double_conv_forward.1
$region0: #{double_conv_forward.1}
  #allocation0 [shape = 'u32[]', space=smem, size = 0x4, offset = 0x4, fixed_abs, tag = 'smem constant byte address 0x4 - core index']
  #allocation1 [shape = 'u32[72,128]{1,0:T(1,128)}', space=vmem, size = 0x9000, scoped, tag = 'internal scratch']
  #allocation2 [shape = 'bf16[18,128]{1,0:T(8,128)(2,1)}', space=vmem, size = 0x1800, scoped, tag = 'scratch operand']
  %s0 = inlined_call_operand.vmem [shape: bf16[2,18,64], index: 0, kind: input, shape index: {}]
  %s1 = inlined_call_operand.vmem [shape: bf16[3,64,128], index: 1, kind: input, shape index: {}]
  %s2 = inlined_call_operand.vmem [shape: bf16[3,128,128], index: 2, kind: input, shape index: {}]
  %s3 = inlined_call_operand.vmem [shape: f32[1,128], index: 3, kind: input, shape index: {}]
  %s4 = inlined_call_operand.vmem [shape: f32[1,128], index: 4, kind: input, shape index: {}]
  %s5 = inlined_call_operand.vmem [shape: f32[1,128], index: 5, kind: input, shape index: {}]
  %s6 = inlined_call_operand.vmem [shape: f32[1,128], index: 6, kind: input, shape index: {}]
  %s7 = inlined_call_operand.vmem [shape: f32[2,16,128], index: 7, kind: output, shape index: {}]
  %s8 = sld [smem:[#allocation0]]
  $region61: #{double_conv_forward.1} parent=0
    _
  %s10 = ssub.s32 1, %s8
  %s11 = scalar_select 0, %s10, %s8
  loop: start=0, step=1, limit=4
  $region2: #{double_conv_forward.1} parent=0 // loop_pre_header
    _
  $region3: #{double_conv_forward.1} parent=0 // loop_header
    %s13 = sphi 0, %s17
    %p14 = scmp.ge.s32.totalorder %s13, 4
    %s23 = sphi 0, %s25
    %s26 = sphi 0, %s23
    %s27 = sphi 0, %s26
    %s43 = sphi 0, %s27
    %s47 = sphi 0, %s47
    %s49 = sphi 0, %s47
    %s50 = sphi 0, %s49
    %s64 = sphi 0, %s50
    %s68 = sphi 0, %s68
    %s70 = sphi 0, %s68
    %s71 = sphi 0, %s70
    %s85 = sphi 0, %s71
    %s89 = sphi 0, %s89
    %s91 = sphi 0, %s89
    %s92 = sphi 0, %s91
    %s106 = sphi 0, %s92
    %s110 = sphi 0, %s110
    %s112 = sphi 0, %s110
    %s113 = sphi 0, %s112
    %s127 = sphi 0, %s113
    %s131 = sphi 0, %s131
    %s133 = sphi 0, %s131
    %s134 = sphi 0, %s133
    %s148 = sphi 0, %s134
    %s152 = sphi 0, %s152
    %s154 = sphi 0, %s152
    %s155 = sphi 0, %s154
    %s169 = sphi 0, %s155
    %s175 = sphi 0, %s177
    %s178 = sphi 0, %s175
    %s179 = sphi 0, %s178
    %s195 = sphi 0, %s179
  $region4: #{double_conv_forward.1} parent=0 // loop_header_branch
    %16 = sbr.rel (%p14) target = $region8
  $region5: #{double_conv_forward.1} parent=0 // loop_body
    %s18 = ssub.s32 %s13, 1
    %s19 = ssub.s32 %s13, 2
    %s20 = sadd.s32 %s13, 1
    %s21 = ssub.s32 %s13, %s20
    %p22 = scmp.eq.s32.totalorder %s21, 0
    %s24 = sadd.s32 %s23, 1
    %s25 = scalar_select %p22, %s23, %s24
    %p28 = pneg %p22
    %p29 = scmp.eq.s32.totalorder %s13, 1
    %p30 = por %p28, %p29
    %p31 = scmp.ne.s32.totalorder %s23, %s26
    %p32 = scmp.eq.s32.totalorder %s13, 0
    %p33 = por %p31, %p32
    %p34 = scmp.ne.s32.totalorder %s23, %s26
    %p35 = scmp.eq.s32.totalorder %s18, 1
    %p36 = por %p34, %p35
    %p37 = scmp.ne.s32.totalorder %s26, %s27
    %p38 = scmp.eq.s32.totalorder %s18, 0
    %p39 = por %p37, %p38
    %p40 = scmp.ne.s32.totalorder %s26, %s27
    %p41 = scmp.eq.s32.totalorder %s19, 1
    %p42 = por %p40, %p41
    %p44 = scmp.ne.s32.totalorder %s27, %s43
    %p45 = scmp.eq.s32.totalorder %s19, 0
    %p46 = por %p44, %p45
    %s48 = sadd.s32 %s47, 1
    %p51 = scmp.eq.s32.totalorder %s13, 1
    %p52 = scmp.ne.s32.totalorder %s47, %s49
    %p53 = scmp.eq.s32.totalorder %s13, 0
    %p54 = por %p52, %p53
    %p55 = scmp.ne.s32.totalorder %s47, %s49
    %p56 = scmp.eq.s32.totalorder %s18, 1
    %p57 = por %p55, %p56
    %p58 = scmp.ne.s32.totalorder %s49, %s50
    %p59 = scmp.eq.s32.totalorder %s18, 0
    %p60 = por %p58, %p59
    %p61 = scmp.ne.s32.totalorder %s49, %s50
    %p62 = scmp.eq.s32.totalorder %s19, 1
    %p63 = por %p61, %p62
    %p65 = scmp.ne.s32.totalorder %s50, %s64
    %p66 = scmp.eq.s32.totalorder %s19, 0
    %p67 = por %p65, %p66
    %s69 = sadd.s32 %s68, 1
    %p72 = scmp.eq.s32.totalorder %s13, 1
    %p73 = scmp.ne.s32.totalorder %s68, %s70
    %p74 = scmp.eq.s32.totalorder %s13, 0
    %p75 = por %p73, %p74
    %p76 = scmp.ne.s32.totalorder %s68, %s70
    %p77 = scmp.eq.s32.totalorder %s18, 1
    %p78 = por %p76, %p77
    %p79 = scmp.ne.s32.totalorder %s70, %s71
    %p80 = scmp.eq.s32.totalorder %s18, 0
    %p81 = por %p79, %p80
    %p82 = scmp.ne.s32.totalorder %s70, %s71
    %p83 = scmp.eq.s32.totalorder %s19, 1
    %p84 = por %p82, %p83
    %p86 = scmp.ne.s32.totalorder %s71, %s85
    %p87 = scmp.eq.s32.totalorder %s19, 0
    %p88 = por %p86, %p87
    %s90 = sadd.s32 %s89, 1
    %p93 = scmp.eq.s32.totalorder %s13, 1
    %p94 = scmp.ne.s32.totalorder %s89, %s91
    %p95 = scmp.eq.s32.totalorder %s13, 0
    %p96 = por %p94, %p95
    %p97 = scmp.ne.s32.totalorder %s89, %s91
    %p98 = scmp.eq.s32.totalorder %s18, 1
    %p99 = por %p97, %p98
    %p100 = scmp.ne.s32.totalorder %s91, %s92
    %p101 = scmp.eq.s32.totalorder %s18, 0
    %p102 = por %p100, %p101
    %p103 = scmp.ne.s32.totalorder %s91, %s92
    %p104 = scmp.eq.s32.totalorder %s19, 1
    %p105 = por %p103, %p104
    %p107 = scmp.ne.s32.totalorder %s92, %s106
    %p108 = scmp.eq.s32.totalorder %s19, 0
    %p109 = por %p107, %p108
    %s111 = sadd.s32 %s110, 1
    %p114 = scmp.eq.s32.totalorder %s13, 1
    %p115 = scmp.ne.s32.totalorder %s110, %s112
    %p116 = scmp.eq.s32.totalorder %s13, 0
    %p117 = por %p115, %p116
    %p118 = scmp.ne.s32.totalorder %s110, %s112
    %p119 = scmp.eq.s32.totalorder %s18, 1
    %p120 = por %p118, %p119
    %p121 = scmp.ne.s32.totalorder %s112, %s113
    %p122 = scmp.eq.s32.totalorder %s18, 0
    %p123 = por %p121, %p122
    %p124 = scmp.ne.s32.totalorder %s112, %s113
    %p125 = scmp.eq.s32.totalorder %s19, 1
    %p126 = por %p124, %p125
    %p128 = scmp.ne.s32.totalorder %s113, %s127
    %p129 = scmp.eq.s32.totalorder %s19, 0
    %p130 = por %p128, %p129
    %s132 = sadd.s32 %s131, 1
    %p135 = scmp.eq.s32.totalorder %s13, 1
    %p136 = scmp.ne.s32.totalorder %s131, %s133
    %p137 = scmp.eq.s32.totalorder %s13, 0
    %p138 = por %p136, %p137
    %p139 = scmp.ne.s32.totalorder %s131, %s133
    %p140 = scmp.eq.s32.totalorder %s18, 1
    %p141 = por %p139, %p140
    %p142 = scmp.ne.s32.totalorder %s133, %s134
    %p143 = scmp.eq.s32.totalorder %s18, 0
    %p144 = por %p142, %p143
    %p145 = scmp.ne.s32.totalorder %s133, %s134
    %p146 = scmp.eq.s32.totalorder %s19, 1
    %p147 = por %p145, %p146
    %p149 = scmp.ne.s32.totalorder %s134, %s148
    %p150 = scmp.eq.s32.totalorder %s19, 0
    %p151 = por %p149, %p150
    %s153 = sadd.s32 %s152, 1
    %p156 = scmp.eq.s32.totalorder %s13, 1
    %p157 = scmp.ne.s32.totalorder %s152, %s154
    %p158 = scmp.eq.s32.totalorder %s13, 0
    %p159 = por %p157, %p158
    %p160 = scmp.ne.s32.totalorder %s152, %s154
    %p161 = scmp.eq.s32.totalorder %s18, 1
    %p162 = por %p160, %p161
    %p163 = scmp.ne.s32.totalorder %s154, %s155
    %p164 = scmp.eq.s32.totalorder %s18, 0
    %p165 = por %p163, %p164
    %p166 = scmp.ne.s32.totalorder %s154, %s155
    %p167 = scmp.eq.s32.totalorder %s19, 1
    %p168 = por %p166, %p167
    %p170 = scmp.ne.s32.totalorder %s155, %s169
    %p171 = scmp.eq.s32.totalorder %s19, 0
    %p172 = por %p170, %p171
    %s173 = ssub.s32 %s13, %s20
    %p174 = scmp.eq.s32.totalorder %s173, 0
    %s176 = sadd.s32 %s175, 1
    %s177 = scalar_select %p174, %s175, %s176
    %p180 = pneg %p174
    %p181 = scmp.eq.s32.totalorder %s13, 1
    %p182 = por %p180, %p181
    %p183 = scmp.ne.s32.totalorder %s175, %s178
    %p184 = scmp.eq.s32.totalorder %s13, 0
    %p185 = por %p183, %p184
    %p186 = scmp.ne.s32.totalorder %s175, %s178
    %p187 = scmp.eq.s32.totalorder %s18, 1
    %p188 = por %p186, %p187
    %p189 = scmp.ne.s32.totalorder %s178, %s179
    %p190 = scmp.eq.s32.totalorder %s18, 0
    %p191 = por %p189, %p190
    %p192 = scmp.ne.s32.totalorder %s178, %s179
    %p193 = scmp.eq.s32.totalorder %s19, 1
    %p194 = por %p192, %p193
    %p196 = scmp.ne.s32.totalorder %s179, %s195
    %p197 = scmp.eq.s32.totalorder %s19, 0
    %p198 = por %p196, %p197
    %p199 = scmp.le.s32.totalorder 1, %s13
    %p200 = scmp.lt.s32.totalorder %s13, 3
    %p201 = pnand %p199, %p200
    %p202 = pneg %p201
    // Predicated region
    $region9: #{double_conv_forward.1} parent=5 // pred_check
      _
    $region10: #{double_conv_forward.1} parent=5 // pred_check_branch
      %204 = sbr.rel (%p201) target = $region12
    $region11: #{double_conv_forward.1} parent=5 // pred_region
      %s205 = ssub.s32 %s13, 1
      // Predicated region
      $region13: #{double_conv_forward.1} parent=11 // pred_check
        %p206 = pneg %p60
      $region14: #{double_conv_forward.1} parent=11 // pred_check_branch
        %208 = sbr.rel (%p206) target = $region16
      $region15: #{double_conv_forward.1} parent=11 // pred_region
        _
      $region16: #{double_conv_forward.1} parent=11 // pred_fallthru
        _
      // Predicated region
      $region17: #{double_conv_forward.1} parent=11 // pred_check
        %p209 = pneg %p81
      $region18: #{double_conv_forward.1} parent=11 // pred_check_branch
        %211 = sbr.rel (%p209) target = $region20
      $region19: #{double_conv_forward.1} parent=11 // pred_region
        _
      $region20: #{double_conv_forward.1} parent=11 // pred_fallthru
        _
      // Predicated region
      $region21: #{double_conv_forward.1} parent=11 // pred_check
        %p212 = pneg %p102
      $region22: #{double_conv_forward.1} parent=11 // pred_check_branch
        %214 = sbr.rel (%p212) target = $region24
      $region23: #{double_conv_forward.1} parent=11 // pred_region
        _
      $region24: #{double_conv_forward.1} parent=11 // pred_fallthru
        _
      // Predicated region
      $region25: #{double_conv_forward.1} parent=11 // pred_check
        %p215 = pneg %p123
      $region26: #{double_conv_forward.1} parent=11 // pred_check_branch
        %217 = sbr.rel (%p215) target = $region28
      $region27: #{double_conv_forward.1} parent=11 // pred_region
        _
      $region28: #{double_conv_forward.1} parent=11 // pred_fallthru
        _
      // Predicated region
      $region29: #{double_conv_forward.1} parent=11 // pred_check
        %p218 = pneg %p144
      $region30: #{double_conv_forward.1} parent=11 // pred_check_branch
        %220 = sbr.rel (%p218) target = $region32
      $region31: #{double_conv_forward.1} parent=11 // pred_region
        _
      $region32: #{double_conv_forward.1} parent=11 // pred_fallthru
        _
      // Predicated region
      $region33: #{double_conv_forward.1} parent=11 // pred_check
        %p221 = pneg %p165
      $region34: #{double_conv_forward.1} parent=11 // pred_check_branch
        %223 = sbr.rel (%p221) target = $region36
      $region35: #{double_conv_forward.1} parent=11 // pred_region
        _
      $region36: #{double_conv_forward.1} parent=11 // pred_fallthru
        _
    $region12: #{double_conv_forward.1} parent=5 // pred_fallthru
      _
    %p224 = scmp.lt.s32.totalorder %s13, 2
    // Predicated region
    $region37: #{double_conv_forward.1} parent=5 // pred_check
      %p225 = pneg %p224
    $region38: #{double_conv_forward.1} parent=5 // pred_check_branch
      %227 = sbr.rel (%p225) target = $region40
    $region39: #{double_conv_forward.1} parent=5 // pred_region
      // Predicated region
      $region41: #{double_conv_forward.1} parent=39 // pred_check
        %p228 = pneg %p33
      $region42: #{double_conv_forward.1} parent=39 // pred_check_branch
        %230 = sbr.rel (%p228) target = $region44
      $region43: #{double_conv_forward.1} parent=39 // pred_region
        %p231 = scmp.lt.s32.totalorder %s13, 1
        %s232 = scalar_select %p231, %s13, 1
        %s233 = smul.addr %s232, 3
        %s234 = smul.addr %s233, 4
        %s235 = scalar_lea.vmem %s0, %s234
      $region44: #{double_conv_forward.1} parent=39 // pred_fallthru
        _
    $region40: #{double_conv_forward.1} parent=5 // pred_fallthru
      _
    %p236 = scmp.le.s32.totalorder 1, %s13
    %p237 = scmp.lt.s32.totalorder %s13, 3
    %p238 = pnand %p236, %p237
    %p239 = pneg %p238
    // Predicated region
    $region45: #{double_conv_forward.1} parent=5 // pred_check
      _
    $region46: #{double_conv_forward.1} parent=5 // pred_check_branch
      %241 = sbr.rel (%p238) target = $region48
    $region47: #{double_conv_forward.1} parent=5 // pred_region
      %s242 = ssub.s32 %s13, 1
      %p243 = scmp.lt.s32.totalorder %s18, 1
      %s244 = scalar_select %p243, %s18, 1
      %s245 = smul.addr %s244, 3
      %s246 = smul.addr %s245, 4
      %s247 = scalar_lea.vmem %s0, %s246
      %p248 = pneg %p39
      %p249 = pneg %p36
      %p250 = pneg %p60
      %p251 = pneg %p57
      %p252 = pneg %p81
      %p253 = pneg %p78
      %p254 = pneg %p102
      %p255 = pneg %p99
      %p256 = pneg %p123
      %p257 = pneg %p120
      %p258 = pneg %p144
      %p259 = pneg %p141
      %p260 = pneg %p165
      %p261 = pneg %p162
      %p262 = pneg %p191
      %p263 = pneg %p188
      %p264 = scmp.lt.s32.totalorder %s18, 1
      %s265 = scalar_select %p264, %s18, 1
      %s266 = smul.addr %s265, 2
      %s267 = smul.addr %s266, 8
      %s268 = scalar_lea.vmem %s7, %s267
      %p269 = scmp.lt.s32.totalorder %s18, 1
      %s270 = scalar_select %p269, %s18, 1
      %s271 = smul.addr %s270, 3
      %s272 = smul.addr %s271, 4
      %s273 = scalar_lea.vmem %s0, %s272
      %p274 = scmp.lt.s32.totalorder %s18, 1
      %s275 = scalar_select %p274, %s18, 1
      %s276 = smul.addr %s275, 2
      %s277 = smul.addr %s276, 8
      %s278 = scalar_lea.vmem %s7, %s277
      %v280 = vld [vmem:[%s273] sm:$0xf]
      %v281 = vld [vmem:[%s273 + $0x4] sm:$0xf]
      %v282 = vld [vmem:[%s1] sm:$0xf]
      %v283 = vld [vmem:[%s1 + $0x4] sm:$0xf]
      %v284 = vld [vmem:[%s1 + $0x8] sm:$0xf]
      %v285 = vld [vmem:[%s1 + $0xc] sm:$0xf]
      %v286 = vld [vmem:[%s1 + $0x10] sm:$0xf]
      %v287 = vld [vmem:[%s1 + $0x14] sm:$0xf]
      %v288 = vld [vmem:[%s1 + $0x18] sm:$0xf]
      %v289 = vld [vmem:[%s1 + $0x1c] sm:$0xf]
      %v290 = vld [vmem:[%s273 + $0x8] sm:$0x1]
      %s291 = scalar_lea.vmem %s1, 32
      %v292 = vld [vmem:[%s291] sm:$0xf]
      %v293 = vld [vmem:[%s291 + $0x4] sm:$0xf]
      %v294 = vld [vmem:[%s291 + $0x8] sm:$0xf]
      %v295 = vld [vmem:[%s291 + $0xc] sm:$0xf]
      %v296 = vld [vmem:[%s291 + $0x10] sm:$0xf]
      %v297 = vld [vmem:[%s291 + $0x14] sm:$0xf]
      %v298 = vld [vmem:[%s291 + $0x18] sm:$0xf]
      %v299 = vld [vmem:[%s291 + $0x1c] sm:$0xf]
      %v303 = vunpack.c.l.b16 %v280
      %v304 = vunpack.c.l.b16 %v281
      %v305 = vunpack.c.l.b16 %v290
      %v306 = vpack.c.b16 %v304, %v303
      %v307 = vpack.c.b16 %v305, %v305
      %vm308 = vsmask.f32 7424
      %v310 = vshrl.u32 %v306, 16
      %v312 = vshll.u32 %v306, 16
      %v314 = vrot.slane %v312, 1
      %v315 = vor.u32 %v310, %v314
      %v317 = vshll.u32 %v307, 16
      %v319 = vrot.slane %v317, 1
      %v320 = vsel %vm308, %v315, %v319
      %v329 = vunpack.c.l.b16 %v292
      %v330 = vunpack.c.l.b16 %v293
      %v331 = vunpack.c.l.b16 %v294
      %v332 = vunpack.c.l.b16 %v295
      %v333 = vunpack.c.l.b16 %v296
      %v334 = vunpack.c.l.b16 %v297
      %v335 = vunpack.c.l.b16 %v298
      %v336 = vunpack.c.l.b16 %v299
      %v337 = vpack.c.b16 %v330, %v329
      %v338 = vpack.c.b16 %v332, %v331
      %v339 = vpack.c.b16 %v334, %v333
      %v340 = vpack.c.b16 %v336, %v335
      %vm345 = vcmask 523264
      %v347 = vsel %vm345, %v320, 0
      %349 = vmatpush.bf16.msra.mxu0 0
      %350 = vmatpush.bf16.msra.mxu0 0
      %351 = vmatpush.bf16.msra.mxu0 0
      %352 = vmatpush.bf16.msra.mxu0 0
      %353 = vmatpush.bf16.msra.mxu0 %v340
      %354 = vmatpush.bf16.msra.mxu0 %v339
      %355 = vmatpush.bf16.msra.mxu0 %v338
      %356 = vmatpush.bf16.msra.mxu0 %v337
      %357 = vmatmul.bf16.gmra.mxu0 %v347
      %v358 = vpop.f32.mrf.mxu0
      %v359 = vadd.f32 0.0, %v358
      %v360 = vpop.f32.mrf.mxu0
      %v361 = vadd.f32 0.0, %v360
      %362 = vdwg.mxu0
      %v371 = vunpack.c.l.b16 %v282
      %v372 = vunpack.c.l.b16 %v283
      %v373 = vunpack.c.l.b16 %v284
      %v374 = vunpack.c.l.b16 %v285
      %v375 = vunpack.c.l.b16 %v286
      %v376 = vunpack.c.l.b16 %v287
      %v377 = vunpack.c.l.b16 %v288
      %v378 = vunpack.c.l.b16 %v289
      %v379 = vpack.c.b16 %v372, %v371
      %v380 = vpack.c.b16 %v374, %v373
      %v381 = vpack.c.b16 %v376, %v375
      %v382 = vpack.c.b16 %v378, %v377
      %v387 = vsel %vm345, %v306, 0
      %389 = vmatpush.bf16.msra.mxu0 0
      %390 = vmatpush.bf16.msra.mxu0 0
      %391 = vmatpush.bf16.msra.mxu0 0
      %392 = vmatpush.bf16.msra.mxu0 0
      %393 = vmatpush.bf16.msra.mxu0 %v382
      %394 = vmatpush.bf16.msra.mxu0 %v381
      %395 = vmatpush.bf16.msra.mxu0 %v380
      %396 = vmatpush.bf16.msra.mxu0 %v379
      %397 = vmatmul.bf16.gmra.mxu0 %v387
      %v398 = vpop.f32.mrf.mxu0
      %v399 = vadd.f32 %v359, %v398
      %v400 = vpop.f32.mrf.mxu0
      %v401 = vadd.f32 %v361, %v400
      %402 = vdwg.mxu0
      %v403 = vld [vmem:[%s273] sm:$0xe]
      %s404 = scalar_lea.vmem %s1, 64
      %v405 = vld [vmem:[%s404] sm:$0xf]
      %v406 = vld [vmem:[%s404 + $0x4] sm:$0xf]
      %v407 = vld [vmem:[%s404 + $0x8] sm:$0xf]
      %v408 = vld [vmem:[%s404 + $0xc] sm:$0xf]
      %v409 = vld [vmem:[%s404 + $0x10] sm:$0xf]
      %v410 = vld [vmem:[%s404 + $0x14] sm:$0xf]
      %v411 = vld [vmem:[%s404 + $0x18] sm:$0xf]
      %v412 = vld [vmem:[%s404 + $0x1c] sm:$0xf]
      %v414 = vunpack.c.l.b16 %v403
      %v415 = vpack.c.b16 %v304, %v414
      %vm416 = vcmask 1046528
      %v417 = vrot.slane %v415, 1
      %v418 = vrot.slane %v307, 1
      %v419 = vsel %vm416, %v417, %v418
      %v428 = vunpack.c.l.b16 %v405
      %v429 = vunpack.c.l.b16 %v406
      %v430 = vunpack.c.l.b16 %v407
      %v431 = vunpack.c.l.b16 %v408
      %v432 = vunpack.c.l.b16 %v409
      %v433 = vunpack.c.l.b16 %v410
      %v434 = vunpack.c.l.b16 %v411
      %v435 = vunpack.c.l.b16 %v412
      %v436 = vpack.c.b16 %v429, %v428
      %v437 = vpack.c.b16 %v431, %v430
      %v438 = vpack.c.b16 %v433, %v432
      %v439 = vpack.c.b16 %v435, %v434
      %v445 = vsel %vm345, %v419, 0
      %447 = vmatpush.bf16.msra.mxu0 0
      %448 = vmatpush.bf16.msra.mxu0 0
      %449 = vmatpush.bf16.msra.mxu0 0
      %450 = vmatpush.bf16.msra.mxu0 0
      %451 = vmatpush.bf16.msra.mxu0 %v439
      %452 = vmatpush.bf16.msra.mxu0 %v438
      %453 = vmatpush.bf16.msra.mxu0 %v437
      %454 = vmatpush.bf16.msra.mxu0 %v436
      %455 = vmatmul.bf16.gmra.mxu0 %v445
      %v456 = vpop.f32.mrf.mxu0
      %v457 = vadd.f32 0.0, %v456
      %v458 = vpop.f32.mrf.mxu0
      %v459 = vadd.f32 0.0, %v458
      %460 = vdwg.mxu0
      %v461 = vadd.f32 %v399, %v457
      %v462 = vadd.f32 %v401, %v459
      %v463 = vld [vmem:[%s3] sm:$0x1]
      %v465 = vperm.slane %v463, 0
      %v467 = vmul.f32 %v461, %v465
      %v468 = vmul.f32 %v462, %v465
      %v469 = vld [vmem:[%s4] sm:$0x1]
      %v471 = vperm.slane %v469, 0
      %v473 = vadd.f32 %v467, %v471
      %v474 = vadd.f32 %v468, %v471
      %v475 = vmax.f32 %v473, 0.0
      %v476 = vmax.f32 %v474, 0.0
      %477 = vst [vmem:[#allocation2] sm:$0xf] 0
      %478 = vst [vmem:[#allocation2 + $0x4] sm:$0xf] 0
      %479 = vst [vmem:[#allocation2 + $0x8] sm:$0x1] 0
      %v480 = vpack.c.bf16 %v475, %v475
      %v481 = vpack.c.bf16 %v476, %v476
      %vm482 = vsmask.f32 256
      %vm483 = vsmask.f32 4368
      %vm484 = vmor %vm482, %vm483
      %v486 = vshrl.u32 %v480, 16
      %v488 = vrot.slane %v486, 7
      %v489 = vshll.u32 %v480, 16
      %v491 = vor.u32 %v488, %v489
      %v492 = vrot.slane %v488, 4
      %v494 = vshrl.u32 %v481, 16
      %v496 = vrot.slane %v494, 7
      %v497 = vshll.u32 %v481, 16
      %v499 = vor.u32 %v496, %v497
      %v500 = vsel %vm484, %v492, %v499
      %v501 = vrot.slane %v496, 4
      %vm505 = vcmask 1043456
      %vm506 = vsmask.f32 7938
      %vm507 = vmand %vm505, %vm506
      %v508 = vld [vmem:[#allocation2] sm:$0xf]
      %v509 = vsel %vm507, %v491, %v508
      %510 = vst [vmem:[#allocation2] sm:$0xf] %v509
      %511 = vst [vmem:[#allocation2 + $0x4] sm:$0xf] %v500
      %vm512 = vcmask 1040384
      %vm513 = vmand %vm512, %vm482
      %v514 = vld [vmem:[#allocation2 + $0x8] sm:$0x1]
      %v515 = vsel %vm513, %v501, %v514
      %516 = vst [vmem:[#allocation2 + $0x8] sm:$0x1] %v515
      %v517 = vld [vmem:[#allocation2] sm:$0xf]
      %v518 = vld [vmem:[#allocation2 + $0x4] sm:$0xf]
      %v519 = vld [vmem:[%s2] sm:$0xf]
      %v520 = vld [vmem:[%s2 + $0x4] sm:$0xf]
      %v521 = vld [vmem:[%s2 + $0x8] sm:$0xf]
      %v522 = vld [vmem:[%s2 + $0xc] sm:$0xf]
      %v523 = vld [vmem:[%s2 + $0x10] sm:$0xf]
      %v524 = vld [vmem:[%s2 + $0x14] sm:$0xf]
      %v525 = vld [vmem:[%s2 + $0x18] sm:$0xf]
      %v526 = vld [vmem:[%s2 + $0x1c] sm:$0xf]
      %v527 = vld [vmem:[%s2 + $0x20] sm:$0xf]
      %v528 = vld [vmem:[%s2 + $0x24] sm:$0xf]
      %v529 = vld [vmem:[%s2 + $0x28] sm:$0xf]
      %v530 = vld [vmem:[%s2 + $0x2c] sm:$0xf]
      %v531 = vld [vmem:[%s2 + $0x30] sm:$0xf]
      %v532 = vld [vmem:[%s2 + $0x34] sm:$0xf]
      %v533 = vld [vmem:[%s2 + $0x38] sm:$0xf]
      %v534 = vld [vmem:[%s2 + $0x3c] sm:$0xf]
      %v535 = vld [vmem:[#allocation2 + $0x8] sm:$0x1]
      %s536 = scalar_lea.vmem %s2, 64
      %v537 = vld [vmem:[%s536] sm:$0xf]
      %v538 = vld [vmem:[%s536 + $0x4] sm:$0xf]
      %v539 = vld [vmem:[%s536 + $0x8] sm:$0xf]
      %v540 = vld [vmem:[%s536 + $0xc] sm:$0xf]
      %v541 = vld [vmem:[%s536 + $0x10] sm:$0xf]
      %v542 = vld [vmem:[%s536 + $0x14] sm:$0xf]
      %v543 = vld [vmem:[%s536 + $0x18] sm:$0xf]
      %v544 = vld [vmem:[%s536 + $0x1c] sm:$0xf]
      %v545 = vld [vmem:[%s536 + $0x20] sm:$0xf]
      %v546 = vld [vmem:[%s536 + $0x24] sm:$0xf]
      %v547 = vld [vmem:[%s536 + $0x28] sm:$0xf]
      %v548 = vld [vmem:[%s536 + $0x2c] sm:$0xf]
      %v549 = vld [vmem:[%s536 + $0x30] sm:$0xf]
      %v550 = vld [vmem:[%s536 + $0x34] sm:$0xf]
      %v551 = vld [vmem:[%s536 + $0x38] sm:$0xf]
      %v552 = vld [vmem:[%s536 + $0x3c] sm:$0xf]
      %v556 = vunpack.c.l.b16 %v517
      %v557 = vunpack.c.l.b16 %v518
      %v558 = vunpack.c.l.b16 %v535
      %v559 = vpack.c.b16 %v557, %v556
      %v560 = vpack.c.b16 %v558, %v558
      %v562 = vshrl.u32 %v559, 16
      %v564 = vshll.u32 %v559, 16
      %v566 = vrot.slane %v564, 1
      %v567 = vor.u32 %v562, %v566
      %v569 = vshll.u32 %v560, 16
      %v571 = vrot.slane %v569, 1
      %v572 = vsel %vm308, %v567, %v571
      %v590 = vunpack.c.l.b16 %v537
      %v591 = vunpack.c.l.b16 %v538
      %v592 = vunpack.c.l.b16 %v539
      %v593 = vunpack.c.l.b16 %v540
      %v594 = vunpack.c.l.b16 %v541
      %v595 = vunpack.c.l.b16 %v542
      %v596 = vunpack.c.l.b16 %v543
      %v597 = vunpack.c.l.b16 %v544
      %v598 = vunpack.c.l.b16 %v545
      %v599 = vunpack.c.l.b16 %v546
      %v600 = vunpack.c.l.b16 %v547
      %v601 = vunpack.c.l.b16 %v548
      %v602 = vunpack.c.l.b16 %v549
      %v603 = vunpack.c.l.b16 %v550
      %v604 = vunpack.c.l.b16 %v551
      %v605 = vunpack.c.l.b16 %v552
      %v606 = vpack.c.b16 %v591, %v590
      %v607 = vpack.c.b16 %v593, %v592
      %v608 = vpack.c.b16 %v595, %v594
      %v609 = vpack.c.b16 %v597, %v596
      %v610 = vpack.c.b16 %v599, %v598
      %v611 = vpack.c.b16 %v601, %v600
      %v612 = vpack.c.b16 %v603, %v602
      %v613 = vpack.c.b16 %v605, %v604
      %622 = vmatpush.bf16.msra.mxu0 %v613
      %623 = vmatpush.bf16.msra.mxu0 %v612
      %624 = vmatpush.bf16.msra.mxu0 %v611
      %625 = vmatpush.bf16.msra.mxu0 %v610
      %626 = vmatpush.bf16.msra.mxu0 %v609
      %627 = vmatpush.bf16.msra.mxu0 %v608
      %628 = vmatpush.bf16.msra.mxu0 %v607
      %629 = vmatpush.bf16.msra.mxu0 %v606
      %630 = vmatmul.bf16.gmra.mxu0 %v572
      %v631 = vpop.f32.mrf.mxu0
      %v632 = vadd.f32 0.0, %v631
      %v633 = vpop.f32.mrf.mxu0
      %v634 = vadd.f32 0.0, %v633
      %635 = vdwg.mxu0
      %v653 = vunpack.c.l.b16 %v519
      %v654 = vunpack.c.l.b16 %v520
      %v655 = vunpack.c.l.b16 %v521
      %v656 = vunpack.c.l.b16 %v522
      %v657 = vunpack.c.l.b16 %v523
      %v658 = vunpack.c.l.b16 %v524
      %v659 = vunpack.c.l.b16 %v525
      %v660 = vunpack.c.l.b16 %v526
      %v661 = vunpack.c.l.b16 %v527
      %v662 = vunpack.c.l.b16 %v528
      %v663 = vunpack.c.l.b16 %v529
      %v664 = vunpack.c.l.b16 %v530
      %v665 = vunpack.c.l.b16 %v531
      %v666 = vunpack.c.l.b16 %v532
      %v667 = vunpack.c.l.b16 %v533
      %v668 = vunpack.c.l.b16 %v534
      %v669 = vpack.c.b16 %v654, %v653
      %v670 = vpack.c.b16 %v656, %v655
      %v671 = vpack.c.b16 %v658, %v657
      %v672 = vpack.c.b16 %v660, %v659
      %v673 = vpack.c.b16 %v662, %v661
      %v674 = vpack.c.b16 %v664, %v663
      %v675 = vpack.c.b16 %v666, %v665
      %v676 = vpack.c.b16 %v668, %v667
      %685 = vmatpush.bf16.msra.mxu0 %v676
      %686 = vmatpush.bf16.msra.mxu0 %v675
      %687 = vmatpush.bf16.msra.mxu0 %v674
      %688 = vmatpush.bf16.msra.mxu0 %v673
      %689 = vmatpush.bf16.msra.mxu0 %v672
      %690 = vmatpush.bf16.msra.mxu0 %v671
      %691 = vmatpush.bf16.msra.mxu0 %v670
      %692 = vmatpush.bf16.msra.mxu0 %v669
      %693 = vmatmul.bf16.gmra.mxu0 %v559
      %v694 = vpop.f32.mrf.mxu0
      %v695 = vadd.f32 %v632, %v694
      %v696 = vpop.f32.mrf.mxu0
      %v697 = vadd.f32 %v634, %v696
      %698 = vdwg.mxu0
      %v699 = vld [vmem:[#allocation2] sm:$0xe]
      %s700 = scalar_lea.vmem %s2, 128
      %v701 = vld [vmem:[%s700] sm:$0xf]
      %v702 = vld [vmem:[%s700 + $0x4] sm:$0xf]
      %v703 = vld [vmem:[%s700 + $0x8] sm:$0xf]
      %v704 = vld [vmem:[%s700 + $0xc] sm:$0xf]
      %v705 = vld [vmem:[%s700 + $0x10] sm:$0xf]
      %v706 = vld [vmem:[%s700 + $0x14] sm:$0xf]
      %v707 = vld [vmem:[%s700 + $0x18] sm:$0xf]
      %v708 = vld [vmem:[%s700 + $0x1c] sm:$0xf]
      %v709 = vld [vmem:[%s700 + $0x20] sm:$0xf]
      %v710 = vld [vmem:[%s700 + $0x24] sm:$0xf]
      %v711 = vld [vmem:[%s700 + $0x28] sm:$0xf]
      %v712 = vld [vmem:[%s700 + $0x2c] sm:$0xf]
      %v713 = vld [vmem:[%s700 + $0x30] sm:$0xf]
      %v714 = vld [vmem:[%s700 + $0x34] sm:$0xf]
      %v715 = vld [vmem:[%s700 + $0x38] sm:$0xf]
      %v716 = vld [vmem:[%s700 + $0x3c] sm:$0xf]
      %v718 = vunpack.c.l.b16 %v699
      %v719 = vpack.c.b16 %v557, %v718
      %v720 = vrot.slane %v719, 1
      %v721 = vrot.slane %v560, 1
      %v722 = vsel %vm416, %v720, %v721
      %v740 = vunpack.c.l.b16 %v701
      %v741 = vunpack.c.l.b16 %v702
      %v742 = vunpack.c.l.b16 %v703
      %v743 = vunpack.c.l.b16 %v704
      %v744 = vunpack.c.l.b16 %v705
      %v745 = vunpack.c.l.b16 %v706
      %v746 = vunpack.c.l.b16 %v707
      %v747 = vunpack.c.l.b16 %v708
      %v748 = vunpack.c.l.b16 %v709
      %v749 = vunpack.c.l.b16 %v710
      %v750 = vunpack.c.l.b16 %v711
      %v751 = vunpack.c.l.b16 %v712
      %v752 = vunpack.c.l.b16 %v713
      %v753 = vunpack.c.l.b16 %v714
      %v754 = vunpack.c.l.b16 %v715
      %v755 = vunpack.c.l.b16 %v716
      %v756 = vpack.c.b16 %v741, %v740
      %v757 = vpack.c.b16 %v743, %v742
      %v758 = vpack.c.b16 %v745, %v744
      %v759 = vpack.c.b16 %v747, %v746
      %v760 = vpack.c.b16 %v749, %v748
      %v761 = vpack.c.b16 %v751, %v750
      %v762 = vpack.c.b16 %v753, %v752
      %v763 = vpack.c.b16 %v755, %v754
      %772 = vmatpush.bf16.msra.mxu0 %v763
      %773 = vmatpush.bf16.msra.mxu0 %v762
      %774 = vmatpush.bf16.msra.mxu0 %v761
      %775 = vmatpush.bf16.msra.mxu0 %v760
      %776 = vmatpush.bf16.msra.mxu0 %v759
      %777 = vmatpush.bf16.msra.mxu0 %v758
      %778 = vmatpush.bf16.msra.mxu0 %v757
      %779 = vmatpush.bf16.msra.mxu0 %v756
      %780 = vmatmul.bf16.gmra.mxu0 %v722
      %v781 = vpop.f32.mrf.mxu0
      %v782 = vadd.f32 0.0, %v781
      %v783 = vpop.f32.mrf.mxu0
      %v784 = vadd.f32 0.0, %v783
      %785 = vdwg.mxu0
      %v786 = vadd.f32 %v695, %v782
      %v787 = vadd.f32 %v697, %v784
      %v788 = vld [vmem:[%s5] sm:$0x1]
      %v790 = vperm.slane %v788, 0
      %v792 = vmul.f32 %v786, %v790
      %v793 = vmul.f32 %v787, %v790
      %v794 = vld [vmem:[%s6] sm:$0x1]
      %v796 = vperm.slane %v794, 0
      %v798 = vadd.f32 %v792, %v796
      %v799 = vadd.f32 %v793, %v796
      %v800 = vmax.f32 %v798, 0.0
      %v801 = vmax.f32 %v799, 0.0
      %802 = vst [vmem:[%s278] sm:$0xff] %v800
      %803 = vst [vmem:[%s278 + $0x8] sm:$0xff] %v801
      %p804 = scmp.lt.s32.totalorder %s18, 1
      %s805 = scalar_select %p804, %s18, 1
      %s806 = smul.addr %s805, 2
      %s807 = smul.addr %s806, 8
      %s808 = scalar_lea.vmem %s7, %s807
      // Predicated region
      $region49: #{double_conv_forward.1} parent=47 // pred_check
        %p809 = pneg %p188
      $region50: #{double_conv_forward.1} parent=47 // pred_check_branch
        %811 = sbr.rel (%p809) target = $region52
      $region51: #{double_conv_forward.1} parent=47 // pred_region
        _
      $region52: #{double_conv_forward.1} parent=47 // pred_fallthru
        _
    $region48: #{double_conv_forward.1} parent=5 // pred_fallthru
      _
    %p812 = scmp.le.s32.totalorder 2, %s13
    // Predicated region
    $region53: #{double_conv_forward.1} parent=5 // pred_check
      %p813 = pneg %p812
    $region54: #{double_conv_forward.1} parent=5 // pred_check_branch
      %815 = sbr.rel (%p813) target = $region56
    $region55: #{double_conv_forward.1} parent=5 // pred_region
      %s816 = ssub.s32 %s13, 2
      // Predicated region
      $region57: #{double_conv_forward.1} parent=55 // pred_check
        %p817 = pneg %p194
      $region58: #{double_conv_forward.1} parent=55 // pred_check_branch
        %819 = sbr.rel (%p817) target = $region60
      $region59: #{double_conv_forward.1} parent=55 // pred_region
        %p820 = scmp.lt.s32.totalorder %s19, 1
        %s821 = scalar_select %p820, %s19, 1
        %s822 = smul.addr %s821, 2
        %s823 = smul.addr %s822, 8
        %s824 = scalar_lea.vmem %s7, %s823
      $region60: #{double_conv_forward.1} parent=55 // pred_fallthru
        _
    $region56: #{double_conv_forward.1} parent=5 // pred_fallthru
      _
  $region6: #{double_conv_forward.1} parent=0 // loop_footer
    %s17 = sadd.s32 1, %s13
  $region7: #{double_conv_forward.1} parent=0 // loop_footer_branch
    %12 = sbr.rel target = $region3
  $region8: #{double_conv_forward.1} parent=0 // loop_exit
    _

</llo_original>
